<compile_context>
chip_gen: v7x
topology: tpu7x:2x2x1
jax: 0.10.0
libtpu: 0.0.40
codegen_flags: <defaults>
</compile_context>

<pallas_src>
import jax
import jax.numpy as jnp
from jax.experimental import pallas as pl
from jax.experimental.pallas import tpu as pltpu

_LANE = 128
_SUBLANE = 8


def _round_up(x, m):
    return (x + m - 1) // m * m


def _pad_to(x, shape):
    return jnp.pad(x, [(0, t - s) for s, t in zip(x.shape, shape)])


def _choose_batch_tile(batch, block_b):
    """Pick a batch tile (multiple of 8) that keeps padding <= ~12.5% and,
    when the batch is big enough, yields >= 2 grid steps (both v7x cores)."""
    b8 = _round_up(max(batch, 1), _SUBLANE)
    cap = b8 if b8 <= _SUBLANE else _round_up(pl.cdiv(b8, 2), _SUBLANE)
    max_tb = max(_SUBLANE, (min(block_b, cap) // _SUBLANE) * _SUBLANE)
    tb = _SUBLANE  # fallback: zero padding, many steps
    for cand in range(max_tb, _SUBLANE - 1, -_SUBLANE):
        waste = _round_up(b8, cand) - b8
        if waste * 8 <= b8:          # <= 12.5% padded rows
            tb = cand
            break
    return tb, _round_up(b8, tb)


# -----------------------------------------------------------------------------
# Pallas kernel: one batch tile of the fused 3-layer MLP
#   priv   = onehot(range_idx) @ emb_proj        (in-kernel embedding gather,
#                                                  emb_proj already contains b1)
#   h1     = relu(pub @ W1_pub + priv)           (main_net layer 1, fused emb)
#   h2     = relu(h1  @ W2     + b2)             (main_net layer 2)
#   logits =      h2  @ Wv     + bv              (value head) -> bf16 store
# bf16 matmul operands, f32 accumulation / bias-add / ReLU.
# -----------------------------------------------------------------------------
def _avrg_net_kernel(idx_ref, pub_ref, emb_ref, w1_ref, w2_ref, b2_ref,
                     wv_ref, bv_ref, out_ref):
    tb = idx_ref.shape[0]
    r_pad = emb_ref.shape[0]

    # In-kernel embedding gather as an exact one-hot matmul on the MXU
    # (MXU has large slack in this HBM-bound kernel; avoids relying on
    # dynamic-gather lowering).  idx_ref is [tb, 1] int32.
    one_hot = (idx_ref[...] ==
               jax.lax.broadcasted_iota(jnp.int32, (tb, r_pad), 1)
               ).astype(jnp.bfloat16)                                   # [tb, R]
    priv = jnp.dot(one_hot, emb_ref[...],
                   preferred_element_type=jnp.float32)                  # [tb, H]

    pub = pub_ref[...].astype(jnp.bfloat16)                             # cast in-kernel
    h1 = jnp.dot(pub, w1_ref[...], preferred_element_type=jnp.float32) + priv
    h1 = jnp.maximum(h1, 0.0).astype(jnp.bfloat16)

    h2 = jnp.dot(h1, w2_ref[...], preferred_element_type=jnp.float32)
    h2 = jnp.maximum(h2 + b2_ref[...], 0.0).astype(jnp.bfloat16)

    logits = jnp.dot(h2, wv_ref[...], preferred_element_type=jnp.float32)
    out_ref[...] = (logits + bv_ref[...]).astype(out_ref.dtype)         # bf16 store


def avrg_strategy_net_forward(pub_obs_feat, range_idxs, prepared, *,
                              block_b=2048):
    """Forward pass.

    pub_obs_feat : f32[B, n_pub_features]  (flattened public observation)
    range_idxs   : i32[B]                  (private range indices)
    prepared     : output of prepare_params()
    returns      : f32[B, n_actions]       (pre-softmax logits)
    """
    p = prepared
    B, F = pub_obs_feat.shape
    F_pad, H_pad = p["w1_pub"].shape
    R_pad = p["emb_proj"].shape[0]
    U_pad = p["w2"].shape[1]
    A_pad = p["wv"].shape[1]
    n_actions = p["n_actions"]

    tb, B_pad = _choose_batch_tile(B, block_b)

    # Stream pub as f32 (no wrapper cast pass); pad only batch / sublane dims.
    pub = _pad_to(pub_obs_feat.astype(jnp.float32), (B_pad, F_pad))
    idx = _pad_to(range_idxs.astype(jnp.int32).reshape(B, 1), (B_pad, 1))

    batch_map = lambda i: (i, 0)     # streamed, tiled over batch
    resident_map = lambda i: (0, 0)  # weights/biases/emb stay resident in VMEM

    # TODO(synk): if the pub/idx input DMA is still exposed at production batch
    # sizes, sweep pipeline_mode=pl.Buffered(3) on the streamed specs last.
    out = pl.pallas_call(
        _avrg_net_kernel,
        out_shape=jax.ShapeDtypeStruct((B_pad, A_pad), jnp.bfloat16),
        grid=(B_pad // tb,),
        in_specs=[
            pl.BlockSpec((tb, 1), batch_map),            # range indices (i32)
            pl.BlockSpec((tb, F_pad), batch_map),        # pub features (f32)
            pl.BlockSpec((R_pad, H_pad), resident_map),  # emb_proj (incl. b1)
            pl.BlockSpec((F_pad, H_pad), resident_map),  # W1 (public rows)
            pl.BlockSpec((H_pad, U_pad), resident_map),  # W2
            pl.BlockSpec((1, U_pad), resident_map),      # b2
            pl.BlockSpec((U_pad, A_pad), resident_map),  # Wv
            pl.BlockSpec((1, A_pad), resident_map),      # bv
        ],
        out_specs=pl.BlockSpec((tb, A_pad), batch_map),
        compiler_params=pltpu.CompilerParams(
            dimension_semantics=("parallel",)),
    )(idx, pub, p["emb_proj"], p["w1_pub"], p["w2"], p["b2"], p["wv"], p["bv"])

    return out[:B, :n_actions].astype(jnp.float32)


# -----------------------------------------------------------------------------
# Parameters: f32 "master" params (PyTorch-default Linear init), then a
# TPU-friendly prepared form (bf16, lane-padded, embedding pre-projected
# with b1 folded in).
# -----------------------------------------------------------------------------
def init_params(key, *, n_ranges, priv_dim, n_pub_features, hidden,
                output_units, n_actions):
    def linear(k, fan_in, fan_out):
        kw, kb = jax.random.split(k)
        bound = 1.0 / jnp.sqrt(fan_in)          # PyTorch default Linear init
        w = jax.random.uniform(kw, (fan_in, fan_out), jnp.float32,
                               -bound, bound)
        b = jax.random.uniform(kb, (1, fan_out), jnp.float32, -bound, bound)
        return w, b

    k_emb, k1, k2, kv = jax.random.split(key, 4)
    d_in = n_pub_features + priv_dim
    w1, b1 = linear(k1, d_in, hidden)
    w2, b2 = linear(k2, hidden, output_units)
    wv, bv = linear(kv, output_units, n_actions)
    range_emb = jax.random.normal(k_emb, (n_ranges, priv_dim), jnp.float32)
    return dict(range_emb=range_emb, w1=w1, b1=b1, w2=w2, b2=b2,
                wv=wv, bv=bv)


def prepare_params(params, *, n_pub_features):
    """Pad to (8, 128)-friendly shapes, cast matmul operands to bf16, and fold
    the range-embedding lookup AND b1 into a pre-projected [n_ranges, H] table.
    NOTE: emb_proj is a derived parameter -- regenerate whenever range_emb/W1/b1
    change."""
    F = n_pub_features
    w1 = params["w1"]                       # [F + priv_dim, hidden]
    hidden = w1.shape[1]
    output_units = params["w2"].shape[1]
    n_actions = params["wv"].shape[1]
    n_ranges = params["range_emb"].shape[0]

    F_pad = _round_up(F, _SUBLANE)
    H_pad = _round_up(hidden, _LANE)
    U_pad = _round_up(output_units, _LANE)
    A_pad = _round_up(n_actions, _LANE)
    R_pad = _round_up(n_ranges, _LANE)      # clean K for the one-hot matmul

    w1_pub = w1[:F]                         # [F, hidden]
    w1_priv = w1[F:]                        # [priv_dim, hidden]
    # emb_proj[r] = range_emb[r] @ W1_priv + b1   (computed in f32, stored bf16)
    emb_proj = jnp.dot(params["range_emb"], w1_priv) + params["b1"]

    return dict(
        w1_pub=_pad_to(w1_pub, (F_pad, H_pad)).astype(jnp.bfloat16),
        emb_proj=_pad_to(emb_proj, (R_pad, H_pad)).astype(jnp.bfloat16),
        w2=_pad_to(params["w2"], (H_pad, U_pad)).astype(jnp.bfloat16),
        b2=_pad_to(params["b2"], (1, U_pad)).astype(jnp.float32),
        wv=_pad_to(params["wv"], (U_pad, A_pad)).astype(jnp.bfloat16),
        bv=_pad_to(params["bv"], (1, A_pad)).astype(jnp.float32),
        n_actions=n_actions,
    )


# -----------------------------------------------------------------------------
# References
# -----------------------------------------------------------------------------
def _reference_forward_bf16(pub_obs_feat, range_idxs, prepared):
    """Same math as the kernel (bf16 operands, f32 acc, bf16 output), plain JAX."""
    p = prepared
    F_pad = p["w1_pub"].shape[0]
    pub = _pad_to(pub_obs_feat.astype(jnp.float32),
                  (pub_obs_feat.shape[0], F_pad)).astype(jnp.bfloat16)
    priv = jnp.take(p["emb_proj"], range_idxs, axis=0).astype(jnp.float32)
    h1 = jnp.dot(pub, p["w1_pub"], preferred_element_type=jnp.float32) + priv
    h1 = jnp.maximum(h1, 0.0).astype(jnp.bfloat16)
    h2 = jnp.dot(h1, p["w2"], preferred_element_type=jnp.float32)
    h2 = jnp.maximum(h2 + p["b2"], 0.0).astype(jnp.bfloat16)
    logits = jnp.dot(h2, p["wv"], preferred_element_type=jnp.float32) + p["bv"]
    return logits.astype(jnp.bfloat16).astype(jnp.float32)[:, :p["n_actions"]]


def _reference_forward_f32(pub_obs_feat, range_idxs, params):
    """Original-module math in f32 (unpadded, unfused)."""
    priv = jnp.take(params["range_emb"], range_idxs, axis=0)
    x = jnp.concatenate([pub_obs_feat, priv], axis=-1).astype(jnp.float32)
    h1 = jnp.maximum(x @ params["w1"] + params["b1"], 0.0)
    h2 = jnp.maximum(h1 @ params["w2"] + params["b2"], 0.0)
    return h2 @ params["wv"] + params["bv"]


if __name__ == "__main__":
    # Small, module-consistent shapes.
    B = 2                # batch (len(pub_obses))
    HIST_LEN = 8         # history_len of each pub_obs array
    N_PUB_FEATURES = 24  # n_features per timestep
    N_RANGES = 16        # size of the range-index embedding table
    PRIV_DIM = 8         # private (hole-card) embedding width
    HIDDEN = 32          # main_net hidden units
    OUTPUT_UNITS = 32    # main_net.output_units
    N_ACTIONS = 4        # env_bldr.N_ACTIONS

    key = jax.random.PRNGKey(0)
    k_params, k_obs, k_idx = jax.random.split(key, 3)

    params = init_params(k_params, n_ranges=N_RANGES, priv_dim=PRIV_DIM,
                         n_pub_features=N_PUB_FEATURES, hidden=HIDDEN,
                         output_units=OUTPUT_UNITS, n_actions=N_ACTIONS)
    prepared = prepare_params(params, n_pub_features=N_PUB_FEATURES)

    # pub_obses is a list of [history_len, n_features] arrays; the FLAT
    # MainPokerModule consumes the current (last) observation of each history.
    pub_obses = [
        jax.random.normal(jax.random.fold_in(k_obs, i),
                          (HIST_LEN, N_PUB_FEATURES), jnp.float32)
        for i in range(B)
    ]
    pub_obs_feat = jnp.stack([o[-1] for o in pub_obses], axis=0)  # [B, F]
    range_idxs = jax.random.randint(k_idx, (B,), 0, N_RANGES, jnp.int32)

    logits = avrg_strategy_net_forward(pub_obs_feat, range_idxs, prepared)
    logits = jax.block_until_ready(logits)

    ref_bf16 = _reference_forward_bf16(pub_obs_feat, range_idxs, prepared)
    ref_f32 = _reference_forward_f32(pub_obs_feat, range_idxs, params)

    assert logits.shape == (B, N_ACTIONS)
    assert jnp.allclose(logits, ref_bf16, atol=2e-2, rtol=2e-2), "bf16-path mismatch"
    assert jnp.allclose(logits, ref_f32, atol=5e-2, rtol=5e-2), "f32 module mismatch"

    print("KERNEL_OK")
</pallas_src>

<mosaic_0001>
module attributes {stable_mosaic.version = 11 : i64} {
  func.func @_avrg_net_kernel(%arg0: i32, %arg1: memref<8x1xi32, #tpu.memory_space<vmem>>, %arg2: memref<8x24xf32, #tpu.memory_space<vmem>>, %arg3: memref<128x128xbf16, #tpu.memory_space<vmem>>, %arg4: memref<24x128xbf16, #tpu.memory_space<vmem>>, %arg5: memref<128x128xbf16, #tpu.memory_space<vmem>>, %arg6: memref<1x128xf32, #tpu.memory_space<vmem>>, %arg7: memref<128x128xbf16, #tpu.memory_space<vmem>>, %arg8: memref<1x128xf32, #tpu.memory_space<vmem>>, %arg9: memref<8x128xbf16, #tpu.memory_space<vmem>>) attributes {dimension_semantics = [#tpu.dimension_semantics<parallel>], iteration_bounds = array<i64: 1>, scalar_prefetch = 0 : i64, scratch_operands = 0 : i64, tpu.core_type = #tpu.core_type<tc>, window_params = [{transform_indices = @transform_0, window_bounds = array<i64: 8, 1>}, {transform_indices = @transform_1, window_bounds = array<i64: 8, 24>}, {pipeline_mode = #tpu.pipeline_mode<synchronous>, transform_indices = @transform_2, window_bounds = array<i64: 128, 128>}, {pipeline_mode = #tpu.pipeline_mode<synchronous>, transform_indices = @transform_3, window_bounds = array<i64: 24, 128>}, {pipeline_mode = #tpu.pipeline_mode<synchronous>, transform_indices = @transform_4, window_bounds = array<i64: 128, 128>}, {pipeline_mode = #tpu.pipeline_mode<synchronous>, transform_indices = @transform_5, window_bounds = array<i64: 1, 128>}, {pipeline_mode = #tpu.pipeline_mode<synchronous>, transform_indices = @transform_6, window_bounds = array<i64: 128, 128>}, {pipeline_mode = #tpu.pipeline_mode<synchronous>, transform_indices = @transform_7, window_bounds = array<i64: 1, 128>}, {transform_indices = @transform_8, window_bounds = array<i64: 8, 128>}]} {
    %c0 = arith.constant 0 : index
    %c0_0 = arith.constant 0 : index
    %0 = vector.load %arg1[%c0, %c0_0] : memref<8x1xi32, #tpu.memory_space<vmem>>, vector<8x1xi32>
    %1 = tpu.iota {dimensions = array<i32: 1>} : vector<8x128xi32>
    %2 = vector.broadcast %0 : vector<8x1xi32> to vector<8x128xi32>
    %3 = arith.cmpi eq, %2, %1 : vector<8x128xi32>
    %4 = arith.extui %3 : vector<8x128xi1> to vector<8x128xi32>
    %5 = arith.sitofp %4 : vector<8x128xi32> to vector<8x128xf32>
    %6 = arith.truncf %5 : vector<8x128xf32> to vector<8x128xbf16>
    %c0_1 = arith.constant 0 : index
    %c0_2 = arith.constant 0 : index
    %7 = vector.load %arg3[%c0_1, %c0_2] : memref<128x128xbf16, #tpu.memory_space<vmem>>, vector<128x128xbf16>
    %cst = arith.constant dense<0.000000e+00> : vector<8x128xf32>
    %8 = tpu.matmul %6, %7, %cst {dimension_numbers = #tpu.dot_dimension_numbers<[1], [0], [0], [1], [0, 0, 1, 1], [], []>} : vector<8x128xbf16>, vector<128x128xbf16>, vector<8x128xf32> -> vector<8x128xf32>
    %c0_3 = arith.constant 0 : index
    %c0_4 = arith.constant 0 : index
    %9 = vector.load %arg2[%c0_3, %c0_4] : memref<8x24xf32, #tpu.memory_space<vmem>>, vector<8x24xf32>
    %10 = arith.truncf %9 : vector<8x24xf32> to vector<8x24xbf16>
    %c0_5 = arith.constant 0 : index
    %c0_6 = arith.constant 0 : index
    %11 = vector.load %arg4[%c0_5, %c0_6] : memref<24x128xbf16, #tpu.memory_space<vmem>>, vector<24x128xbf16>
    %cst_7 = arith.constant dense<0.000000e+00> : vector<8x128xf32>
    %12 = tpu.matmul %10, %11, %cst_7 {dimension_numbers = #tpu.dot_dimension_numbers<[1], [0], [0], [1], [0, 0, 1, 1], [], []>} : vector<8x24xbf16>, vector<24x128xbf16>, vector<8x128xf32> -> vector<8x128xf32>
    %13 = arith.addf %12, %8 : vector<8x128xf32>
    %cst_8 = arith.constant 0.000000e+00 : f32
    %14 = vector.broadcast %cst_8 : f32 to vector<8x128xf32>
    %15 = arith.maximumf %13, %14 : vector<8x128xf32>
    %16 = arith.truncf %15 : vector<8x128xf32> to vector<8x128xbf16>
    %c0_9 = arith.constant 0 : index
    %c0_10 = arith.constant 0 : index
    %17 = vector.load %arg5[%c0_9, %c0_10] : memref<128x128xbf16, #tpu.memory_space<vmem>>, vector<128x128xbf16>
    %cst_11 = arith.constant dense<0.000000e+00> : vector<8x128xf32>
    %18 = tpu.matmul %16, %17, %cst_11 {dimension_numbers = #tpu.dot_dimension_numbers<[1], [0], [0], [1], [0, 0, 1, 1], [], []>} : vector<8x128xbf16>, vector<128x128xbf16>, vector<8x128xf32> -> vector<8x128xf32>
    %c0_12 = arith.constant 0 : index
    %c0_13 = arith.constant 0 : index
    %19 = vector.load %arg6[%c0_12, %c0_13] : memref<1x128xf32, #tpu.memory_space<vmem>>, vector<1x128xf32>
    %20 = vector.broadcast %19 : vector<1x128xf32> to vector<8x128xf32>
    %21 = arith.addf %18, %20 : vector<8x128xf32>
    %cst_14 = arith.constant 0.000000e+00 : f32
    %22 = vector.broadcast %cst_14 : f32 to vector<8x128xf32>
    %23 = arith.maximumf %21, %22 : vector<8x128xf32>
    %24 = arith.truncf %23 : vector<8x128xf32> to vector<8x128xbf16>
    %c0_15 = arith.constant 0 : index
    %c0_16 = arith.constant 0 : index
    %25 = vector.load %arg7[%c0_15, %c0_16] : memref<128x128xbf16, #tpu.memory_space<vmem>>, vector<128x128xbf16>
    %cst_17 = arith.constant dense<0.000000e+00> : vector<8x128xf32>
    %26 = tpu.matmul %24, %25, %cst_17 {dimension_numbers = #tpu.dot_dimension_numbers<[1], [0], [0], [1], [0, 0, 1, 1], [], []>} : vector<8x128xbf16>, vector<128x128xbf16>, vector<8x128xf32> -> vector<8x128xf32>
    %c0_18 = arith.constant 0 : index
    %c0_19 = arith.constant 0 : index
    %27 = vector.load %arg8[%c0_18, %c0_19] : memref<1x128xf32, #tpu.memory_space<vmem>>, vector<1x128xf32>
    %28 = vector.broadcast %27 : vector<1x128xf32> to vector<8x128xf32>
    %29 = arith.addf %26, %28 : vector<8x128xf32>
    %30 = arith.truncf %29 : vector<8x128xf32> to vector<8x128xbf16>
    %c0_20 = arith.constant 0 : index
    %c0_21 = arith.constant 0 : index
    %31 = vector.load %arg9[%c0_20, %c0_21] : memref<8x128xbf16, #tpu.memory_space<vmem>>, vector<8x128xbf16>
    tpu.vector_store %arg9[%c0_20, %c0_21], %30 {strides = array<i32>} : memref<8x128xbf16, #tpu.memory_space<vmem>>, vector<8x128xbf16>,
    return
  }
  func.func @transform_0(%arg0: i32) -> (i32, i32) {
    %c0_i32 = arith.constant 0 : i32
    %c0_i32_0 = arith.constant 0 : i32
    return %arg0, %c0_i32 : i32, i32
  }
  func.func @transform_1(%arg0: i32) -> (i32, i32) {
    %c0_i32 = arith.constant 0 : i32
    %c0_i32_0 = arith.constant 0 : i32
    return %arg0, %c0_i32 : i32, i32
  }
  func.func @transform_2(%arg0: i32) -> (i32, i32) {
    %c0_i32 = arith.constant 0 : i32
    %c0_i32_0 = arith.constant 0 : i32
    %c0_i32_1 = arith.constant 0 : i32
    return %c0_i32, %c0_i32_0 : i32, i32
  }
  func.func @transform_3(%arg0: i32) -> (i32, i32) {
    %c0_i32 = arith.constant 0 : i32
    %c0_i32_0 = arith.constant 0 : i32
    %c0_i32_1 = arith.constant 0 : i32
    return %c0_i32, %c0_i32_0 : i32, i32
  }
  func.func @transform_4(%arg0: i32) -> (i32, i32) {
    %c0_i32 = arith.constant 0 : i32
    %c0_i32_0 = arith.constant 0 : i32
    %c0_i32_1 = arith.constant 0 : i32
    return %c0_i32, %c0_i32_0 : i32, i32
  }
  func.func @transform_5(%arg0: i32) -> (i32, i32) {
    %c0_i32 = arith.constant 0 : i32
    %c0_i32_0 = arith.constant 0 : i32
    %c0_i32_1 = arith.constant 0 : i32
    return %c0_i32, %c0_i32_0 : i32, i32
  }
  func.func @transform_6(%arg0: i32) -> (i32, i32) {
    %c0_i32 = arith.constant 0 : i32
    %c0_i32_0 = arith.constant 0 : i32
    %c0_i32_1 = arith.constant 0 : i32
    return %c0_i32, %c0_i32_0 : i32, i32
  }
  func.func @transform_7(%arg0: i32) -> (i32, i32) {
    %c0_i32 = arith.constant 0 : i32
    %c0_i32_0 = arith.constant 0 : i32
    %c0_i32_1 = arith.constant 0 : i32
    return %c0_i32, %c0_i32_0 : i32, i32
  }
  func.func @transform_8(%arg0: i32) -> (i32, i32) {
    %c0_i32 = arith.constant 0 : i32
    %c0_i32_0 = arith.constant 0 : i32
    return %arg0, %c0_i32 : i32, i32
  }
}

</mosaic_0001>

<llo_original>
// kernel: tpu_custom_call.1
$region0: #{tpu_custom_call.1}
  #allocation0 [shape = 'u32[]', space=smem, size = 0x4, offset = 0x4, fixed_abs, tag = 'smem constant byte address 0x4 - core index']
  #allocation1 [shape = 'u32[144,128]{1,0:T(1,128)}', space=vmem, size = 0x12000, scoped, tag = 'internal scratch']
  %s0 = inlined_call_operand.vmem [shape: s32[8,1], index: 0, kind: input, shape index: {}]
  %s1 = inlined_call_operand.vmem [shape: f32[8,24], index: 1, kind: input, shape index: {}]
  %s2 = inlined_call_operand.hbm [shape: bf16[128,128], index: 2, kind: input, shape index: {}]
  %s3 = inlined_call_operand.vmem [shape: bf16[24,128], index: 3, kind: input, shape index: {}]
  %s4 = inlined_call_operand.hbm [shape: bf16[128,128], index: 4, kind: input, shape index: {}]
  %s5 = inlined_call_operand.vmem [shape: f32[1,128], index: 5, kind: input, shape index: {}]
  %s6 = inlined_call_operand.hbm [shape: bf16[128,128], index: 6, kind: input, shape index: {}]
  %s7 = inlined_call_operand.vmem [shape: f32[1,128], index: 7, kind: input, shape index: {}]
  %s8 = inlined_call_operand.hbm [shape: bf16[8,128], index: 8, kind: output, shape index: {}]
  %s9 = sld [smem:[#allocation0]]
  $region54: #{tpu_custom_call.1} parent=0
    _
  %s11 = ssub.s32 1, %s9
  %s12 = scalar_select 0, %s11, %s9
  $region1: #{tpu_custom_call.1} parent=0
    #allocation2 [shape = 'u8[32768]{0}', space=vmem, size = 0x8000, scoped, tag = 'input window, operand 2, single buffered']
    #allocation3 [shape = 's32[1]{0}', space=sflag, size = 0x4, scoped, tag = 'scoped memory for tpu_custom_call.1']
    #allocation4 [shape = 's32[1]{0}', space=sflag, size = 0x4, scoped, tag = 'scoped memory for tpu_custom_call.1']
    #allocation5 [shape = 'u8[32768]{0}', space=vmem, size = 0x8000, scoped, tag = 'input window, operand 4, single buffered']
    #allocation6 [shape = 's32[1]{0}', space=sflag, size = 0x4, scoped, tag = 'scoped memory for tpu_custom_call.1']
    #allocation7 [shape = 'u8[32768]{0}', space=vmem, size = 0x8000, scoped, tag = 'input window, operand 6, single buffered']
    #allocation8 [shape = 'u8[2048]{0}', space=vmem, size = 0x800, scoped, tag = 'output window, operand 0, single buffered']
    %13 = vsyncpa [#allocation3], 0
    %14 = vsyncpa [#allocation6], 0
    %15 = vsyncpa [#allocation4], 0
    // Predicated region
    $region2: #{tpu_custom_call.1} parent=1 // pred_check
      _
    $region3: #{tpu_custom_call.1} parent=1 // pred_check_branch
      %17 = sbr.rel (0) target = $region5
    $region4: #{tpu_custom_call.1} parent=1 // pred_region
      _
    $region5: #{tpu_custom_call.1} parent=1 // pred_fallthru
      _
    // Predicated region
    $region6: #{tpu_custom_call.1} parent=1 // pred_check
      _
    $region7: #{tpu_custom_call.1} parent=1 // pred_check_branch
      %19 = sbr.rel (0) target = $region9
    $region8: #{tpu_custom_call.1} parent=1 // pred_region
      _
    $region9: #{tpu_custom_call.1} parent=1 // pred_fallthru
      _
    // Predicated region
    $region10: #{tpu_custom_call.1} parent=1 // pred_check
      _
    $region11: #{tpu_custom_call.1} parent=1 // pred_check_branch
      %21 = sbr.rel (0) target = $region13
    $region12: #{tpu_custom_call.1} parent=1 // pred_region
      %s23 = ssub.s32 1024, 1024
      %24 = vsyncadd [#allocation3], %s23
      %s25 = sshll.u32 [#allocation2], 4
      %s26 = int_to_ptr.vmem [resolvable:$true] %s25
      %31 = dma.hbm_to_vmem [thread:$0]  %s2, 1024, %s26, [#allocation3], 64, 64, 4
    $region13: #{tpu_custom_call.1} parent=1 // pred_fallthru
      _
    // Predicated region
    $region14: #{tpu_custom_call.1} parent=1 // pred_check
      _
    $region15: #{tpu_custom_call.1} parent=1 // pred_check_branch
      %33 = sbr.rel (0) target = $region17
    $region16: #{tpu_custom_call.1} parent=1 // pred_region
      _
    $region17: #{tpu_custom_call.1} parent=1 // pred_fallthru
      _
    // Predicated region
    $region18: #{tpu_custom_call.1} parent=1 // pred_check
      _
    $region19: #{tpu_custom_call.1} parent=1 // pred_check_branch
      %35 = sbr.rel (0) target = $region21
    $region20: #{tpu_custom_call.1} parent=1 // pred_region
      %s37 = ssub.s32 1024, 1024
      %38 = vsyncadd [#allocation6], %s37
      %s39 = sshll.u32 [#allocation5], 4
      %s40 = int_to_ptr.vmem [resolvable:$true] %s39
      %45 = dma.hbm_to_vmem [thread:$0]  %s4, 1024, %s40, [#allocation6], 64, 64, 4
    $region21: #{tpu_custom_call.1} parent=1 // pred_fallthru
      _
    // Predicated region
    $region22: #{tpu_custom_call.1} parent=1 // pred_check
      _
    $region23: #{tpu_custom_call.1} parent=1 // pred_check_branch
      %47 = sbr.rel (0) target = $region25
    $region24: #{tpu_custom_call.1} parent=1 // pred_region
      _
    $region25: #{tpu_custom_call.1} parent=1 // pred_fallthru
      _
    // Predicated region
    $region26: #{tpu_custom_call.1} parent=1 // pred_check
      _
    $region27: #{tpu_custom_call.1} parent=1 // pred_check_branch
      %49 = sbr.rel (0) target = $region29
    $region28: #{tpu_custom_call.1} parent=1 // pred_region
      %s51 = ssub.s32 1024, 1024
      %52 = vsyncadd [#allocation6], %s51
      %s53 = sshll.u32 [#allocation7], 4
      %s54 = int_to_ptr.vmem [resolvable:$true] %s53
      %59 = dma.hbm_to_vmem [thread:$0]  %s6, 1024, %s54, [#allocation6], 64, 64, 4
    $region29: #{tpu_custom_call.1} parent=1 // pred_fallthru
      _
    // Predicated region
    $region30: #{tpu_custom_call.1} parent=1 // pred_check
      _
    $region31: #{tpu_custom_call.1} parent=1 // pred_check_branch
      %61 = sbr.rel (0) target = $region33
    $region32: #{tpu_custom_call.1} parent=1 // pred_region
      _
    $region33: #{tpu_custom_call.1} parent=1 // pred_fallthru
      _
    // Predicated region
    $region34: #{tpu_custom_call.1} parent=1 // pred_check
      _
    $region35: #{tpu_custom_call.1} parent=1 // pred_check_branch
      %63 = sbr.rel (0) target = $region37
    $region36: #{tpu_custom_call.1} parent=1 // pred_region
      %64 = dma.done [#allocation3], 1024
    $region37: #{tpu_custom_call.1} parent=1 // pred_fallthru
      _
    // Predicated region
    $region38: #{tpu_custom_call.1} parent=1 // pred_check
      _
    $region39: #{tpu_custom_call.1} parent=1 // pred_check_branch
      %66 = sbr.rel (0) target = $region41
    $region40: #{tpu_custom_call.1} parent=1 // pred_region
      %67 = dma.done [#allocation6], 1024
    $region41: #{tpu_custom_call.1} parent=1 // pred_fallthru
      _
    // Predicated region
    $region42: #{tpu_custom_call.1} parent=1 // pred_check
      _
    $region43: #{tpu_custom_call.1} parent=1 // pred_check_branch
      %69 = sbr.rel (0) target = $region45
    $region44: #{tpu_custom_call.1} parent=1 // pred_region
      %70 = dma.done [#allocation6], 1024
    $region45: #{tpu_custom_call.1} parent=1 // pred_fallthru
      _
    %v72 = vld [vmem:[%s0] sm:$0xff]
    %v73 = vlaneseq
    %v74 = vand.u32 %v73, 127
    %75 = vset.pattern.permute.xlu0 0
    %76 = vperm.xlu0 %75, %v72
    %v77 = vpop.permute.xlu0 %76
    %vm78 = vcmp.eq.s32.totalorder %v77, %v74
    %v79 = vsel %vm78, 1, 0
    %v80 = vcvt.s32.f32 %v79
    %v81 = vpack.c.bf16 %v80, %v80
    %v82 = vld [vmem:[#allocation2] sm:$0xf]
    %v83 = vld [vmem:[#allocation2 + $0x4] sm:$0xf]
    %v84 = vld [vmem:[#allocation2 + $0x8] sm:$0xf]
    %v85 = vld [vmem:[#allocation2 + $0xc] sm:$0xf]
    %v86 = vld [vmem:[#allocation2 + $0x10] sm:$0xf]
    %v87 = vld [vmem:[#allocation2 + $0x14] sm:$0xf]
    %v88 = vld [vmem:[#allocation2 + $0x18] sm:$0xf]
    %v89 = vld [vmem:[#allocation2 + $0x1c] sm:$0xf]
    %v90 = vld [vmem:[#allocation2 + $0x20] sm:$0xf]
    %v91 = vld [vmem:[#allocation2 + $0x24] sm:$0xf]
    %v92 = vld [vmem:[#allocation2 + $0x28] sm:$0xf]
    %v93 = vld [vmem:[#allocation2 + $0x2c] sm:$0xf]
    %v94 = vld [vmem:[#allocation2 + $0x30] sm:$0xf]
    %v95 = vld [vmem:[#allocation2 + $0x34] sm:$0xf]
    %v96 = vld [vmem:[#allocation2 + $0x38] sm:$0xf]
    %v97 = vld [vmem:[#allocation2 + $0x3c] sm:$0xf]
    %v114 = vunpack.c.l.b16 %v82
    %v115 = vunpack.c.l.b16 %v83
    %v116 = vunpack.c.l.b16 %v84
    %v117 = vunpack.c.l.b16 %v85
    %v118 = vunpack.c.l.b16 %v86
    %v119 = vunpack.c.l.b16 %v87
    %v120 = vunpack.c.l.b16 %v88
    %v121 = vunpack.c.l.b16 %v89
    %v122 = vunpack.c.l.b16 %v90
    %v123 = vunpack.c.l.b16 %v91
    %v124 = vunpack.c.l.b16 %v92
    %v125 = vunpack.c.l.b16 %v93
    %v126 = vunpack.c.l.b16 %v94
    %v127 = vunpack.c.l.b16 %v95
    %v128 = vunpack.c.l.b16 %v96
    %v129 = vunpack.c.l.b16 %v97
    %v130 = vpack.c.b16 %v115, %v114
    %v131 = vpack.c.b16 %v117, %v116
    %v132 = vpack.c.b16 %v119, %v118
    %v133 = vpack.c.b16 %v121, %v120
    %v134 = vpack.c.b16 %v123, %v122
    %v135 = vpack.c.b16 %v125, %v124
    %v136 = vpack.c.b16 %v127, %v126
    %v137 = vpack.c.b16 %v129, %v128
    %146 = vmatprep.subr.bf16.mxu0 0
    %147 = vmatpush1.bf16.msra.mxu0 %v130
    %148 = vmatprep.subr.bf16.mxu0 0
    %149 = vmatpush1.bf16.msra.mxu0 %v131
    %150 = vmatprep.subr.bf16.mxu0 0
    %151 = vmatpush1.bf16.msra.mxu0 %v132
    %152 = vmatprep.subr.bf16.mxu0 0
    %153 = vmatpush1.bf16.msra.mxu0 %v133
    %154 = vmatprep.subr.bf16.mxu0 0
    %155 = vmatpush1.bf16.msra.mxu0 %v134
    %156 = vmatprep.subr.bf16.mxu0 0
    %157 = vmatpush1.bf16.msra.mxu0 %v135
    %158 = vmatprep.subr.bf16.mxu0 0
    %159 = vmatpush1.bf16.msra.mxu0 %v136
    %160 = vmatprep.subr.bf16.mxu0 0
    %161 = vmatpush1.bf16.msra.mxu0 %v137
    %162 = vmatprep.subr.bf16.mxu0 0
    %163 = vmatpush1.bf16.msra.mxu0 0
    %164 = vmatprep.subr.bf16.mxu0 0
    %165 = vmatpush1.bf16.msra.mxu0 0
    %166 = vmatprep.subr.bf16.mxu0 0
    %167 = vmatpush1.bf16.msra.mxu0 0
    %168 = vmatprep.subr.bf16.mxu0 0
    %169 = vmatpush1.bf16.msra.mxu0 0
    %170 = vmatprep.subr.bf16.mxu0 0
    %171 = vmatpush1.bf16.msra.mxu0 0
    %172 = vmatprep.subr.bf16.mxu0 0
    %173 = vmatpush1.bf16.msra.mxu0 0
    %174 = vmatprep.subr.bf16.mxu0 0
    %175 = vmatpush1.bf16.msra.mxu0 0
    %176 = vmatprep.subr.bf16.mxu0 0
    %177 = vmatpush1.bf16.msra.mxu0 0
    %178 = vmatprep.mubr.bf16.mxu0 0
    %179 = vmatmul.mubr.bf16.gmra.mrb[0].mxu0 %v81
    %v180 = vpop.f32.mrb[0].mxu0
    %v181 = vadd.f32 0.0, %v180
    %v182 = vpop.f32.mrb[0].mxu0
    %v183 = vpop.f32.mrb[0].mxu0
    %v184 = vpop.f32.mrb[0].mxu0
    %185 = vdwg.mxu0
    %v186 = vld [vmem:[%s1] sm:$0xff]
    %v187 = vpack.c.bf16 %v186, %v186
    %v188 = vld [vmem:[%s3] sm:$0xf]
    %v189 = vld [vmem:[%s3 + $0x4] sm:$0xf]
    %v190 = vld [vmem:[%s3 + $0x8] sm:$0xf]
    %v194 = vunpack.c.l.b16 %v188
    %v195 = vunpack.c.l.b16 %v189
    %v196 = vunpack.c.l.b16 %v190
    %v197 = vpack.c.b16 %v195, %v194
    %v198 = vpack.c.b16 %v196, %v196
    %vm200 = vcmask 195584
    %v202 = vsel %vm200, %v187, 0
    %vm204 = vcmask 1043456
    %v206 = vsel %vm204, %v198, 0
    %208 = vmatprep.subr.bf16.mxu0 0
    %209 = vmatpush1.bf16.msra.mxu0 %v197
    %210 = vmatprep.subr.bf16.mxu0 0
    %211 = vmatpush1.bf16.msra.mxu0 %v206
    %212 = vmatprep.subr.bf16.mxu0 0
    %213 = vmatpush1.bf16.msra.mxu0 0
    %214 = vmatprep.subr.bf16.mxu0 0
    %215 = vmatpush1.bf16.msra.mxu0 0
    %216 = vmatprep.subr.bf16.mxu0 0
    %217 = vmatpush1.bf16.msra.mxu0 0
    %218 = vmatprep.subr.bf16.mxu0 0
    %219 = vmatpush1.bf16.msra.mxu0 0
    %220 = vmatprep.subr.bf16.mxu0 0
    %221 = vmatpush1.bf16.msra.mxu0 0
    %222 = vmatprep.subr.bf16.mxu0 0
    %223 = vmatpush1.bf16.msra.mxu0 0
    %224 = vmatprep.subr.bf16.mxu0 0
    %225 = vmatpush1.bf16.msra.mxu0 0
    %226 = vmatprep.subr.bf16.mxu0 0
    %227 = vmatpush1.bf16.msra.mxu0 0
    %228 = vmatprep.subr.bf16.mxu0 0
    %229 = vmatpush1.bf16.msra.mxu0 0
    %230 = vmatprep.subr.bf16.mxu0 0
    %231 = vmatpush1.bf16.msra.mxu0 0
    %232 = vmatprep.subr.bf16.mxu0 0
    %233 = vmatpush1.bf16.msra.mxu0 0
    %234 = vmatprep.subr.bf16.mxu0 0
    %235 = vmatpush1.bf16.msra.mxu0 0
    %236 = vmatprep.subr.bf16.mxu0 0
    %237 = vmatpush1.bf16.msra.mxu0 0
    %238 = vmatprep.subr.bf16.mxu0 0
    %239 = vmatpush1.bf16.msra.mxu0 0
    %240 = vmatprep.mubr.bf16.mxu0 0
    %241 = vmatmul.mubr.bf16.gmra.mrb[0].mxu0 %v202
    %v242 = vpop.f32.mrb[0].mxu0
    %v243 = vadd.f32 %v181, %v242
    %v244 = vpop.f32.mrb[0].mxu0
    %v245 = vpop.f32.mrb[0].mxu0
    %v246 = vpop.f32.mrb[0].mxu0
    %247 = vdwg.mxu0
    %v248 = vmax.f32 %v243, 0.0
    %v249 = vpack.c.bf16 %v248, %v248
    %v250 = vld [vmem:[#allocation5] sm:$0xf]
    %v251 = vld [vmem:[#allocation5 + $0x4] sm:$0xf]
    %v252 = vld [vmem:[#allocation5 + $0x8] sm:$0xf]
    %v253 = vld [vmem:[#allocation5 + $0xc] sm:$0xf]
    %v254 = vld [vmem:[#allocation5 + $0x10] sm:$0xf]
    %v255 = vld [vmem:[#allocation5 + $0x14] sm:$0xf]
    %v256 = vld [vmem:[#allocation5 + $0x18] sm:$0xf]
    %v257 = vld [vmem:[#allocation5 + $0x1c] sm:$0xf]
    %v258 = vld [vmem:[#allocation5 + $0x20] sm:$0xf]
    %v259 = vld [vmem:[#allocation5 + $0x24] sm:$0xf]
    %v260 = vld [vmem:[#allocation5 + $0x28] sm:$0xf]
    %v261 = vld [vmem:[#allocation5 + $0x2c] sm:$0xf]
    %v262 = vld [vmem:[#allocation5 + $0x30] sm:$0xf]
    %v263 = vld [vmem:[#allocation5 + $0x34] sm:$0xf]
    %v264 = vld [vmem:[#allocation5 + $0x38] sm:$0xf]
    %v265 = vld [vmem:[#allocation5 + $0x3c] sm:$0xf]
    %v266 = vld [vmem:[%s5] sm:$0x1]
    %v268 = vlaneseq
    %v269 = vshrl.u32 %v268, 7
    %v270 = vsub.s32 0, %v269
    %v271 = vrot.slane %v266, %v270
    %v289 = vunpack.c.l.b16 %v250
    %v290 = vunpack.c.l.b16 %v251
    %v291 = vunpack.c.l.b16 %v252
    %v292 = vunpack.c.l.b16 %v253
    %v293 = vunpack.c.l.b16 %v254
    %v294 = vunpack.c.l.b16 %v255
    %v295 = vunpack.c.l.b16 %v256
    %v296 = vunpack.c.l.b16 %v257
    %v297 = vunpack.c.l.b16 %v258
    %v298 = vunpack.c.l.b16 %v259
    %v299 = vunpack.c.l.b16 %v260
    %v300 = vunpack.c.l.b16 %v261
    %v301 = vunpack.c.l.b16 %v262
    %v302 = vunpack.c.l.b16 %v263
    %v303 = vunpack.c.l.b16 %v264
    %v304 = vunpack.c.l.b16 %v265
    %v305 = vpack.c.b16 %v290, %v289
    %v306 = vpack.c.b16 %v292, %v291
    %v307 = vpack.c.b16 %v294, %v293
    %v308 = vpack.c.b16 %v296, %v295
    %v309 = vpack.c.b16 %v298, %v297
    %v310 = vpack.c.b16 %v300, %v299
    %v311 = vpack.c.b16 %v302, %v301
    %v312 = vpack.c.b16 %v304, %v303
    %321 = vmatprep.subr.bf16.mxu0 0
    %322 = vmatpush1.bf16.msra.mxu0 %v305
    %323 = vmatprep.subr.bf16.mxu0 0
    %324 = vmatpush1.bf16.msra.mxu0 %v306
    %325 = vmatprep.subr.bf16.mxu0 0
    %326 = vmatpush1.bf16.msra.mxu0 %v307
    %327 = vmatprep.subr.bf16.mxu0 0
    %328 = vmatpush1.bf16.msra.mxu0 %v308
    %329 = vmatprep.subr.bf16.mxu0 0
    %330 = vmatpush1.bf16.msra.mxu0 %v309
    %331 = vmatprep.subr.bf16.mxu0 0
    %332 = vmatpush1.bf16.msra.mxu0 %v310
    %333 = vmatprep.subr.bf16.mxu0 0
    %334 = vmatpush1.bf16.msra.mxu0 %v311
    %335 = vmatprep.subr.bf16.mxu0 0
    %336 = vmatpush1.bf16.msra.mxu0 %v312
    %337 = vmatprep.subr.bf16.mxu0 0
    %338 = vmatpush1.bf16.msra.mxu0 0
    %339 = vmatprep.subr.bf16.mxu0 0
    %340 = vmatpush1.bf16.msra.mxu0 0
    %341 = vmatprep.subr.bf16.mxu0 0
    %342 = vmatpush1.bf16.msra.mxu0 0
    %343 = vmatprep.subr.bf16.mxu0 0
    %344 = vmatpush1.bf16.msra.mxu0 0
    %345 = vmatprep.subr.bf16.mxu0 0
    %346 = vmatpush1.bf16.msra.mxu0 0
    %347 = vmatprep.subr.bf16.mxu0 0
    %348 = vmatpush1.bf16.msra.mxu0 0
    %349 = vmatprep.subr.bf16.mxu0 0
    %350 = vmatpush1.bf16.msra.mxu0 0
    %351 = vmatprep.subr.bf16.mxu0 0
    %352 = vmatpush1.bf16.msra.mxu0 0
    %353 = vmatprep.mubr.bf16.mxu0 0
    %354 = vmatmul.mubr.bf16.gmra.mrb[0].mxu0 %v249
    %v355 = vpop.f32.mrb[0].mxu0
    %v356 = vadd.f32 %v271, %v355
    %v357 = vpop.f32.mrb[0].mxu0
    %v358 = vpop.f32.mrb[0].mxu0
    %v359 = vpop.f32.mrb[0].mxu0
    %360 = vdwg.mxu0
    %v361 = vmax.f32 %v356, 0.0
    %v362 = vpack.c.bf16 %v361, %v361
    %v363 = vld [vmem:[#allocation7] sm:$0xf]
    %v364 = vld [vmem:[#allocation7 + $0x4] sm:$0xf]
    %v365 = vld [vmem:[#allocation7 + $0x8] sm:$0xf]
    %v366 = vld [vmem:[#allocation7 + $0xc] sm:$0xf]
    %v367 = vld [vmem:[#allocation7 + $0x10] sm:$0xf]
    %v368 = vld [vmem:[#allocation7 + $0x14] sm:$0xf]
    %v369 = vld [vmem:[#allocation7 + $0x18] sm:$0xf]
    %v370 = vld [vmem:[#allocation7 + $0x1c] sm:$0xf]
    %v371 = vld [vmem:[#allocation7 + $0x20] sm:$0xf]
    %v372 = vld [vmem:[#allocation7 + $0x24] sm:$0xf]
    %v373 = vld [vmem:[#allocation7 + $0x28] sm:$0xf]
    %v374 = vld [vmem:[#allocation7 + $0x2c] sm:$0xf]
    %v375 = vld [vmem:[#allocation7 + $0x30] sm:$0xf]
    %v376 = vld [vmem:[#allocation7 + $0x34] sm:$0xf]
    %v377 = vld [vmem:[#allocation7 + $0x38] sm:$0xf]
    %v378 = vld [vmem:[#allocation7 + $0x3c] sm:$0xf]
    %v379 = vld [vmem:[%s7] sm:$0x1]
    %v381 = vlaneseq
    %v382 = vshrl.u32 %v381, 7
    %v383 = vsub.s32 0, %v382
    %v384 = vrot.slane %v379, %v383
    %v402 = vunpack.c.l.b16 %v363
    %v403 = vunpack.c.l.b16 %v364
    %v404 = vunpack.c.l.b16 %v365
    %v405 = vunpack.c.l.b16 %v366
    %v406 = vunpack.c.l.b16 %v367
    %v407 = vunpack.c.l.b16 %v368
    %v408 = vunpack.c.l.b16 %v369
    %v409 = vunpack.c.l.b16 %v370
    %v410 = vunpack.c.l.b16 %v371
    %v411 = vunpack.c.l.b16 %v372
    %v412 = vunpack.c.l.b16 %v373
    %v413 = vunpack.c.l.b16 %v374
    %v414 = vunpack.c.l.b16 %v375
    %v415 = vunpack.c.l.b16 %v376
    %v416 = vunpack.c.l.b16 %v377
    %v417 = vunpack.c.l.b16 %v378
    %v418 = vpack.c.b16 %v403, %v402
    %v419 = vpack.c.b16 %v405, %v404
    %v420 = vpack.c.b16 %v407, %v406
    %v421 = vpack.c.b16 %v409, %v408
    %v422 = vpack.c.b16 %v411, %v410
    %v423 = vpack.c.b16 %v413, %v412
    %v424 = vpack.c.b16 %v415, %v414
    %v425 = vpack.c.b16 %v417, %v416
    %434 = vmatprep.subr.bf16.mxu0 0
    %435 = vmatpush1.bf16.msra.mxu0 %v418
    %436 = vmatprep.subr.bf16.mxu0 0
    %437 = vmatpush1.bf16.msra.mxu0 %v419
    %438 = vmatprep.subr.bf16.mxu0 0
    %439 = vmatpush1.bf16.msra.mxu0 %v420
    %440 = vmatprep.subr.bf16.mxu0 0
    %441 = vmatpush1.bf16.msra.mxu0 %v421
    %442 = vmatprep.subr.bf16.mxu0 0
    %443 = vmatpush1.bf16.msra.mxu0 %v422
    %444 = vmatprep.subr.bf16.mxu0 0
    %445 = vmatpush1.bf16.msra.mxu0 %v423
    %446 = vmatprep.subr.bf16.mxu0 0
    %447 = vmatpush1.bf16.msra.mxu0 %v424
    %448 = vmatprep.subr.bf16.mxu0 0
    %449 = vmatpush1.bf16.msra.mxu0 %v425
    %450 = vmatprep.subr.bf16.mxu0 0
    %451 = vmatpush1.bf16.msra.mxu0 0
    %452 = vmatprep.subr.bf16.mxu0 0
    %453 = vmatpush1.bf16.msra.mxu0 0
    %454 = vmatprep.subr.bf16.mxu0 0
    %455 = vmatpush1.bf16.msra.mxu0 0
    %456 = vmatprep.subr.bf16.mxu0 0
    %457 = vmatpush1.bf16.msra.mxu0 0
    %458 = vmatprep.subr.bf16.mxu0 0
    %459 = vmatpush1.bf16.msra.mxu0 0
    %460 = vmatprep.subr.bf16.mxu0 0
    %461 = vmatpush1.bf16.msra.mxu0 0
    %462 = vmatprep.subr.bf16.mxu0 0
    %463 = vmatpush1.bf16.msra.mxu0 0
    %464 = vmatprep.subr.bf16.mxu0 0
    %465 = vmatpush1.bf16.msra.mxu0 0
    %466 = vmatprep.mubr.bf16.mxu0 0
    %467 = vmatmul.mubr.bf16.gmra.mrb[0].mxu0 %v362
    %v468 = vpop.f32.mrb[0].mxu0
    %v469 = vadd.f32 %v384, %v468
    %v470 = vpop.f32.mrb[0].mxu0
    %v471 = vpop.f32.mrb[0].mxu0
    %v472 = vpop.f32.mrb[0].mxu0
    %473 = vdwg.mxu0
    %v474 = vpack.c.bf16 %v469, %v469
    %475 = vst [vmem:[#allocation8] sm:$0xf] %v474
    // Predicated region
    $region46: #{tpu_custom_call.1} parent=1 // pred_check
      _
    $region47: #{tpu_custom_call.1} parent=1 // pred_check_branch
      %477 = sbr.rel (0) target = $region49
    $region48: #{tpu_custom_call.1} parent=1 // pred_region
      %s479 = ssub.s32 64, 64
      %480 = vsyncadd [#allocation4], %s479
      %s482 = sshll.u32 [#allocation8], 4
      %s483 = int_to_ptr.vmem [resolvable:$true] %s482
      %485 = dma.vmem_to_hbm [thread:$0]  %s483, 64, %s8, [#allocation4]
    $region49: #{tpu_custom_call.1} parent=1 // pred_fallthru
      _
    // Predicated region
    $region50: #{tpu_custom_call.1} parent=1 // pred_check
      _
    $region51: #{tpu_custom_call.1} parent=1 // pred_check_branch
      %487 = sbr.rel (0) target = $region53
    $region52: #{tpu_custom_call.1} parent=1 // pred_region
      %488 = dma.done [#allocation4], 64
    $region53: #{tpu_custom_call.1} parent=1 // pred_fallthru
      _
    %489 = vsyncpa [#allocation3], 1
    %490 = vsyncpa [#allocation6], 1
    %491 = vsyncpa [#allocation4], 1

</llo_original>
